<compile_context>
chip_gen: v5e
topology: v5e:2x2
jax: 0.10.0
libtpu: 0.0.40
codegen_flags: <defaults>
</compile_context>

<pallas_src>
import functools

import jax
import jax.numpy as jnp
from jax.experimental import pallas as pl
from jax.experimental.pallas import tpu as pltpu


# ---------------------------------------------------------------------------
# Fused kernel: QKV projection + masked softmax attention + output projection
# ---------------------------------------------------------------------------
def _mha_kernel(x_kv_ref, x_q_ref, wq_ref, wkv_ref, wproj_ref, bproj_ref,
                o_ref, ctx_ref, *, num_heads, head_dim, d_out, q_tile,
                compute_dtype, exp_dtype):
    # x_kv_ref:  (1, S,  D_in)   full batch row (K/V projection)      f32
    # x_q_ref:   (1, TQ, D_in)   query-tile rows (Q projection)       f32
    # wq_ref:    (D_in, D_out)   Wq with 1/sqrt(head_dim) folded in   bf16
    # wkv_ref:   (D_in, 2*D_out) fused [Wk | Wv]                      bf16
    # wproj_ref: (D_out, D_out)  output projection weight             bf16
    # bproj_ref: (1, D_out)      output projection bias               f32
    # o_ref:     (1, TQ, D_out)  output tile (lane-dense)
    # ctx_ref:   (TQ, D_out)     f32 VMEM scratch accumulator

    # In-kernel bf16 narrowing of x (no extra wrapper-side HBM pass over x).
    x_kv = x_kv_ref[0].astype(compute_dtype)                 # (S, D_in)
    x_q = x_q_ref[0].astype(compute_dtype)                   # (TQ, D_in)
    s_len = x_kv.shape[0]

    # --- projections: Q on the query tile, wide K|V on the full row --------
    q_all = jnp.dot(x_q, wq_ref[...],
                    preferred_element_type=jnp.float32).astype(compute_dtype)
    kv = jnp.dot(x_kv, wkv_ref[...],
                 preferred_element_type=jnp.float32)         # (S, 2*D_out)
    # Early bf16 narrowing: halves the largest non-score intermediate.
    k_all = kv[:, :d_out].astype(compute_dtype)              # (S, D_out)
    v_all = kv[:, d_out:].astype(compute_dtype)              # (S, D_out)

    # mask = tril(ones, diagonal=1): keep j <= i + 1 (matches the torch buffer)
    q_off = pl.program_id(1) * q_tile
    row = q_off + jax.lax.broadcasted_iota(jnp.int32, (q_tile, s_len), 0)
    col = jax.lax.broadcasted_iota(jnp.int32, (q_tile, s_len), 1)
    keep = col <= row + 1

    # TODO(synk): for hd < 128 the per-head lane slices below are unaligned
    # (masked/relayout stores); pad head_dim to 128 in the weight layout if a
    # bundle dump shows copy ops hot.
    for h in range(num_heads):                               # static head loop
        lo = h * head_dim
        hi = lo + head_dim
        q_h = q_all[:, lo:hi]                                # (TQ, hd) bf16
        k_h = k_all[:, lo:hi]
        v_h = v_all[:, lo:hi]

        # scores = q_h @ k_h^T via dot_general (no explicit transpose / XLU).
        s = jax.lax.dot_general(q_h, k_h, (((1,), (1,)), ((), ())),
                                preferred_element_type=jnp.float32)  # (TQ, S)
        s = jnp.where(keep, s, -jnp.inf)

        # numerically stable softmax; row-max and denominator kept in f32
        m = jnp.max(s, axis=-1, keepdims=True)
        e = jnp.exp((s - m).astype(exp_dtype)).astype(jnp.float32)
        denom = jnp.sum(e, axis=-1, keepdims=True)
        p = (e * pl.reciprocal(denom, approx=True)).astype(compute_dtype)

        # Dropout is identity in eval mode.
        # Write this head's context straight into the scratch accumulator:
        # no per-head list, no lane-axis concat, no long live ranges.
        ctx_ref[:, lo:hi] = jnp.dot(p, v_h,
                                    preferred_element_type=jnp.float32)

    # --- fused output projection + bias, lane-dense store --------------------
    out = jnp.dot(ctx_ref[...].astype(compute_dtype), wproj_ref[...],
                  preferred_element_type=jnp.float32)        # (TQ, D_out)
    o_ref[0] = (out + bproj_ref[...]).astype(o_ref.dtype)


# ---------------------------------------------------------------------------
# One-time weight preparation (call once, cache across forward calls)
# ---------------------------------------------------------------------------
def prepare_mha_params(wq, wk, wv, w_proj, b_proj, num_heads,
                       compute_dtype=jnp.bfloat16):
    """Fold 1/sqrt(head_dim) into Wq, fuse [Wk|Wv], cast MXU operands."""
    d_out = wq.shape[1]
    head_dim = d_out // num_heads
    scale = 1.0 / (float(head_dim) ** 0.5)
    return dict(
        w_q=(wq * scale).astype(compute_dtype),              # (D_in, D_out)
        w_kv=jnp.concatenate([wk, wv], axis=1).astype(compute_dtype),
        w_proj=w_proj.astype(compute_dtype),                 # (D_out, D_out)
        b_proj=b_proj.reshape(1, d_out).astype(jnp.float32),
    )


def _pick_q_tile(s):
    # multiple of 128 when possible; full S for short sequences
    for t in (512, 256, 128):
        if s % t == 0:
            return t
    return s


def _vmem_limit_bytes(S, TQ, D_in, D_out, compute_dtype, out_dtype):
    cd = jnp.dtype(compute_dtype).itemsize
    od = jnp.dtype(out_dtype).itemsize
    f32 = 4
    # double-buffered pipeline blocks
    # TODO(synk): single-buffer the grid-invariant weight specs
    # (pipeline_mode=pl.Buffered(1)) once verified on the target jaxlib.
    pipelined = 2 * (S * D_in * f32 + TQ * D_in * f32
                     + D_in * D_out * cd + D_in * 2 * D_out * cd
                     + D_out * D_out * cd + D_out * f32
                     + TQ * D_out * od)
    live = (S * 2 * D_out * f32          # K|V matmul result (f32 acc)
            + S * 2 * D_out * cd         # k_all / v_all (bf16)
            + TQ * D_out * cd            # q_all
            + 2 * TQ * S * f32           # score tile + exp
            + TQ * D_out * f32)          # ctx scratch
    est = int(1.5 * (pipelined + live))
    return max(16 << 20, min(est, 60 << 20))   # stay under v7x's 64 MiB


# ---------------------------------------------------------------------------
# Wrapper
# ---------------------------------------------------------------------------
def causal_multi_head_attention(x, params, num_heads,
                                compute_dtype=jnp.bfloat16,
                                exp_dtype=jnp.float32,
                                out_dtype=None):
    """
    x:      [B, S, D_in] float32
    params: output of prepare_mha_params (weights already fused/cast/scaled)
    """
    B, S, D_in = x.shape
    D_out = params["w_proj"].shape[0]
    assert D_out % num_heads == 0
    head_dim = D_out // num_heads
    out_dtype = x.dtype if out_dtype is None else out_dtype

    TQ = _pick_q_tile(S)
    n_q = S // TQ

    kernel = functools.partial(
        _mha_kernel, num_heads=num_heads, head_dim=head_dim, d_out=D_out,
        q_tile=TQ, compute_dtype=compute_dtype, exp_dtype=exp_dtype)

    # TODO(synk): for very long sequences add a KV-tile axis with flash-style
    # online softmax (KV tile 256-512 on v6e/v7x, 128-256 on v5e) so the
    # (TQ, S) score tile and full-S K/V stay under v7x's 64 MiB VMEM.
    return pl.pallas_call(
        kernel,
        out_shape=jax.ShapeDtypeStruct((B, S, D_out), out_dtype),
        grid=(B, n_q),
        in_specs=[
            pl.BlockSpec((1, S, D_in), lambda b, q: (b, 0, 0)),     # x (K/V rows)
            pl.BlockSpec((1, TQ, D_in), lambda b, q: (b, q, 0)),    # x (Q tile)
            pl.BlockSpec((D_in, D_out), lambda b, q: (0, 0)),       # Wq (scaled)
            pl.BlockSpec((D_in, 2 * D_out), lambda b, q: (0, 0)),   # [Wk|Wv]
            pl.BlockSpec((D_out, D_out), lambda b, q: (0, 0)),      # Wproj
            pl.BlockSpec((1, D_out), lambda b, q: (0, 0)),          # bias
        ],
        out_specs=pl.BlockSpec((1, TQ, D_out), lambda b, q: (b, q, 0)),
        scratch_shapes=[pltpu.VMEM((TQ, D_out), jnp.float32)],
        compiler_params=pltpu.CompilerParams(
            dimension_semantics=("parallel", "parallel"),
            vmem_limit_bytes=_vmem_limit_bytes(S, TQ, D_in, D_out,
                                               compute_dtype, out_dtype)),
    )(x, x, params["w_q"], params["w_kv"], params["w_proj"], params["b_proj"])


# ---------------------------------------------------------------------------
# Pure-JAX f32 reference (mirrors the PyTorch forward) for verification
# ---------------------------------------------------------------------------
def _reference(x, wq, wk, wv, w_proj, b_proj, num_heads):
    B, S, D_in = x.shape
    D_out = wq.shape[1]
    hd = D_out // num_heads
    q = (x @ wq).reshape(B, S, num_heads, hd).transpose(0, 2, 1, 3)
    k = (x @ wk).reshape(B, S, num_heads, hd).transpose(0, 2, 1, 3)
    v = (x @ wv).reshape(B, S, num_heads, hd).transpose(0, 2, 1, 3)
    scores = jnp.einsum("bhqd,bhkd->bhqk", q, k)
    i = jnp.arange(S)[:, None]
    j = jnp.arange(S)[None, :]
    keep = j <= i + 1          # tril(ones, diagonal=1)
    scores = jnp.where(keep[None, None], scores, -jnp.inf)
    w = jax.nn.softmax(scores / jnp.sqrt(jnp.float32(hd)), axis=-1)
    ctx = (jnp.einsum("bhqk,bhkd->bhqd", w, v)
           .transpose(0, 2, 1, 3).reshape(B, S, D_out))
    return ctx @ w_proj + b_proj


if __name__ == "__main__":
    # Small shapes consistent with the module
    B, S, D_in, D_out, H = 2, 8, 32, 32, 4

    key = jax.random.PRNGKey(0)
    kx, kq, kk, kv, kp, kb = jax.random.split(key, 6)

    x = jax.random.normal(kx, (B, S, D_in), dtype=jnp.float32)
    # torch Linear stores [out, in]; we store the transposed [in, out]
    wq = jax.random.normal(kq, (D_in, D_out), dtype=jnp.float32) * 0.1
    wk = jax.random.normal(kk, (D_in, D_out), dtype=jnp.float32) * 0.1
    wv = jax.random.normal(kv, (D_in, D_out), dtype=jnp.float32) * 0.1
    w_proj = jax.random.normal(kp, (D_out, D_out), dtype=jnp.float32) * 0.1
    b_proj = jax.random.normal(kb, (D_out,), dtype=jnp.float32) * 0.1

    params = prepare_mha_params(wq, wk, wv, w_proj, b_proj, H)  # one-time prep
    out = causal_multi_head_attention(x, params, H)
    out = jax.block_until_ready(out)

    ref = _reference(x, wq, wk, wv, w_proj, b_proj, H)
    assert out.shape == (B, S, D_out)
    # bf16 MXU operands + approx reciprocal -> relaxed tolerance vs f32 ref
    assert jnp.allclose(out, ref, atol=2e-2, rtol=2e-2), "mismatch vs reference"

    print("KERNEL_OK")
</pallas_src>

<mosaic_0001>
module attributes {stable_mosaic.version = 11 : i64} {
  func.func @_mha_kernel(%arg0: i32, %arg1: i32, %arg2: memref<1x8x32xf32, #tpu.memory_space<vmem>>, %arg3: memref<1x8x32xf32, #tpu.memory_space<vmem>>, %arg4: memref<32x32xbf16, #tpu.memory_space<vmem>>, %arg5: memref<32x64xbf16, #tpu.memory_space<vmem>>, %arg6: memref<32x32xbf16, #tpu.memory_space<vmem>>, %arg7: memref<1x32xf32, #tpu.memory_space<vmem>>, %arg8: memref<1x8x32xf32, #tpu.memory_space<vmem>>, %arg9: memref<8x32xf32, #tpu.memory_space<vmem>>) attributes {dimension_semantics = [#tpu.dimension_semantics<parallel>, #tpu.dimension_semantics<parallel>], iteration_bounds = array<i64: 2, 1>, scalar_prefetch = 0 : i64, scratch_operands = 1 : i64, tpu.core_type = #tpu.core_type<tc>, window_params = [{transform_indices = @transform_0, window_bounds = array<i64: 1, 8, 32>}, {transform_indices = @transform_1, window_bounds = array<i64: 1, 8, 32>}, {pipeline_mode = #tpu.pipeline_mode<synchronous>, transform_indices = @transform_2, window_bounds = array<i64: 32, 32>}, {pipeline_mode = #tpu.pipeline_mode<synchronous>, transform_indices = @transform_3, window_bounds = array<i64: 32, 64>}, {pipeline_mode = #tpu.pipeline_mode<synchronous>, transform_indices = @transform_4, window_bounds = array<i64: 32, 32>}, {pipeline_mode = #tpu.pipeline_mode<synchronous>, transform_indices = @transform_5, window_bounds = array<i64: 1, 32>}, {transform_indices = @transform_6, window_bounds = array<i64: 1, 8, 32>}]} {
    %c0 = arith.constant 0 : index
    %c0_0 = arith.constant 0 : index
    %c0_1 = arith.constant 0 : index
    %0 = vector.load %arg2[%c0, %c0_0, %c0_1] : memref<1x8x32xf32, #tpu.memory_space<vmem>>, vector<1x8x32xf32>
    %1 = vector.shape_cast %0 : vector<1x8x32xf32> to vector<8x32xf32>
    %2 = arith.truncf %1 : vector<8x32xf32> to vector<8x32xbf16>
    %c0_2 = arith.constant 0 : index
    %c0_3 = arith.constant 0 : index
    %c0_4 = arith.constant 0 : index
    %3 = vector.load %arg3[%c0_2, %c0_3, %c0_4] : memref<1x8x32xf32, #tpu.memory_space<vmem>>, vector<1x8x32xf32>
    %4 = vector.shape_cast %3 : vector<1x8x32xf32> to vector<8x32xf32>
    %5 = arith.truncf %4 : vector<8x32xf32> to vector<8x32xbf16>
    %c0_5 = arith.constant 0 : index
    %c0_6 = arith.constant 0 : index
    %6 = vector.load %arg4[%c0_5, %c0_6] : memref<32x32xbf16, #tpu.memory_space<vmem>>, vector<32x32xbf16>
    %cst = arith.constant dense<0.000000e+00> : vector<8x32xf32>
    %7 = tpu.matmul %5, %6, %cst {dimension_numbers = #tpu.dot_dimension_numbers<[1], [0], [0], [1], [0, 0, 1, 1], [], []>} : vector<8x32xbf16>, vector<32x32xbf16>, vector<8x32xf32> -> vector<8x32xf32>
    %8 = arith.truncf %7 : vector<8x32xf32> to vector<8x32xbf16>
    %c0_7 = arith.constant 0 : index
    %c0_8 = arith.constant 0 : index
    %9 = vector.load %arg5[%c0_7, %c0_8] : memref<32x64xbf16, #tpu.memory_space<vmem>>, vector<32x64xbf16>
    %cst_9 = arith.constant dense<0.000000e+00> : vector<8x64xf32>
    %10 = tpu.matmul %2, %9, %cst_9 {dimension_numbers = #tpu.dot_dimension_numbers<[1], [0], [0], [1], [0, 0, 1, 1], [], []>} : vector<8x32xbf16>, vector<32x64xbf16>, vector<8x64xf32> -> vector<8x64xf32>
    %11 = vector.extract_strided_slice %10 {offsets = [0, 0], sizes = [8, 32], strides = [1, 1]} : vector<8x64xf32> to vector<8x32xf32>
    %12 = arith.truncf %11 : vector<8x32xf32> to vector<8x32xbf16>
    %13 = vector.extract_strided_slice %10 {offsets = [0, 32], sizes = [8, 32], strides = [1, 1]} : vector<8x64xf32> to vector<8x32xf32>
    %14 = arith.truncf %13 : vector<8x32xf32> to vector<8x32xbf16>
    %c8_i32 = arith.constant 8 : i32
    %15 = arith.muli %arg1, %c8_i32 : i32
    %16 = tpu.iota {dimensions = array<i32: 0>} : vector<8x8xi32>
    %17 = vector.broadcast %15 : i32 to vector<8x8xi32>
    %18 = arith.addi %17, %16 : vector<8x8xi32>
    %19 = tpu.iota {dimensions = array<i32: 1>} : vector<8x8xi32>
    %c1_i32 = arith.constant 1 : i32
    %20 = vector.broadcast %c1_i32 : i32 to vector<8x8xi32>
    %21 = arith.addi %18, %20 : vector<8x8xi32>
    %22 = arith.cmpi sle, %19, %21 : vector<8x8xi32>
    %23 = vector.extract_strided_slice %8 {offsets = [0, 0], sizes = [8, 8], strides = [1, 1]} : vector<8x32xbf16> to vector<8x8xbf16>
    %24 = vector.extract_strided_slice %12 {offsets = [0, 0], sizes = [8, 8], strides = [1, 1]} : vector<8x32xbf16> to vector<8x8xbf16>
    %25 = vector.extract_strided_slice %14 {offsets = [0, 0], sizes = [8, 8], strides = [1, 1]} : vector<8x32xbf16> to vector<8x8xbf16>
    %cst_10 = arith.constant dense<0.000000e+00> : vector<8x8xf32>
    %26 = tpu.matmul %23, %24, %cst_10 {dimension_numbers = #tpu.dot_dimension_numbers<[1], [1], [0], [0], [0, 0, 1, 0], [], []>} : vector<8x8xbf16>, vector<8x8xbf16>, vector<8x8xf32> -> vector<8x8xf32>
    %cst_11 = arith.constant 0xFF800000 : f32
    %27 = vector.broadcast %cst_11 : f32 to vector<8x8xf32>
    %28 = arith.select %22, %26, %27 : vector<8x8xi1>, vector<8x8xf32>
    %cst_12 = arith.constant dense<0xFF800000> : vector<8xf32>
    %29 = vector.multi_reduction <maximumf>, %28, %cst_12 [1] : vector<8x8xf32> to vector<8xf32>
    %30 = vector.shape_cast %29 : vector<8xf32> to vector<8x1xf32>
    %31 = vector.broadcast %30 : vector<8x1xf32> to vector<8x8xf32>
    %32 = arith.subf %28, %31 : vector<8x8xf32>
    %33 = math.exp %32 : vector<8x8xf32>
    %cst_13 = arith.constant dense<0.000000e+00> : vector<8xf32>
    %34 = vector.multi_reduction <add>, %33, %cst_13 [1] : vector<8x8xf32> to vector<8xf32>
    %35 = vector.shape_cast %34 : vector<8xf32> to vector<8x1xf32>
    %36 = tpu.reciprocal %35 {approx = true} : vector<8x1xf32> -> vector<8x1xf32>
    %37 = vector.broadcast %36 : vector<8x1xf32> to vector<8x8xf32>
    %38 = arith.mulf %33, %37 : vector<8x8xf32>
    %39 = arith.truncf %38 : vector<8x8xf32> to vector<8x8xbf16>
    %cst_14 = arith.constant dense<0.000000e+00> : vector<8x8xf32>
    %40 = tpu.matmul %39, %25, %cst_14 {dimension_numbers = #tpu.dot_dimension_numbers<[1], [0], [0], [1], [0, 0, 1, 1], [], []>} : vector<8x8xbf16>, vector<8x8xbf16>, vector<8x8xf32> -> vector<8x8xf32>
    %c0_15 = arith.constant 0 : index
    %c0_16 = arith.constant 0 : index
    %41 = vector.load %arg9[%c0_15, %c0_16] : memref<8x32xf32, #tpu.memory_space<vmem>>, vector<8x8xf32>
    tpu.vector_store %arg9[%c0_15, %c0_16], %40 {strides = array<i32>} : memref<8x32xf32, #tpu.memory_space<vmem>>, vector<8x8xf32>,
    %42 = vector.extract_strided_slice %8 {offsets = [0, 8], sizes = [8, 8], strides = [1, 1]} : vector<8x32xbf16> to vector<8x8xbf16>
    %43 = vector.extract_strided_slice %12 {offsets = [0, 8], sizes = [8, 8], strides = [1, 1]} : vector<8x32xbf16> to vector<8x8xbf16>
    %44 = vector.extract_strided_slice %14 {offsets = [0, 8], sizes = [8, 8], strides = [1, 1]} : vector<8x32xbf16> to vector<8x8xbf16>
    %cst_17 = arith.constant dense<0.000000e+00> : vector<8x8xf32>
    %45 = tpu.matmul %42, %43, %cst_17 {dimension_numbers = #tpu.dot_dimension_numbers<[1], [1], [0], [0], [0, 0, 1, 0], [], []>} : vector<8x8xbf16>, vector<8x8xbf16>, vector<8x8xf32> -> vector<8x8xf32>
    %cst_18 = arith.constant 0xFF800000 : f32
    %46 = vector.broadcast %cst_18 : f32 to vector<8x8xf32>
    %47 = arith.select %22, %45, %46 : vector<8x8xi1>, vector<8x8xf32>
    %cst_19 = arith.constant dense<0xFF800000> : vector<8xf32>
    %48 = vector.multi_reduction <maximumf>, %47, %cst_19 [1] : vector<8x8xf32> to vector<8xf32>
    %49 = vector.shape_cast %48 : vector<8xf32> to vector<8x1xf32>
    %50 = vector.broadcast %49 : vector<8x1xf32> to vector<8x8xf32>
    %51 = arith.subf %47, %50 : vector<8x8xf32>
    %52 = math.exp %51 : vector<8x8xf32>
    %cst_20 = arith.constant dense<0.000000e+00> : vector<8xf32>
    %53 = vector.multi_reduction <add>, %52, %cst_20 [1] : vector<8x8xf32> to vector<8xf32>
    %54 = vector.shape_cast %53 : vector<8xf32> to vector<8x1xf32>
    %55 = tpu.reciprocal %54 {approx = true} : vector<8x1xf32> -> vector<8x1xf32>
    %56 = vector.broadcast %55 : vector<8x1xf32> to vector<8x8xf32>
    %57 = arith.mulf %52, %56 : vector<8x8xf32>
    %58 = arith.truncf %57 : vector<8x8xf32> to vector<8x8xbf16>
    %cst_21 = arith.constant dense<0.000000e+00> : vector<8x8xf32>
    %59 = tpu.matmul %58, %44, %cst_21 {dimension_numbers = #tpu.dot_dimension_numbers<[1], [0], [0], [1], [0, 0, 1, 1], [], []>} : vector<8x8xbf16>, vector<8x8xbf16>, vector<8x8xf32> -> vector<8x8xf32>
    %c0_22 = arith.constant 0 : index
    %c8 = arith.constant 8 : index
    %60 = vector.load %arg9[%c0_22, %c8] : memref<8x32xf32, #tpu.memory_space<vmem>>, vector<8x8xf32>
    tpu.vector_store %arg9[%c0_22, %c8], %59 {strides = array<i32>} : memref<8x32xf32, #tpu.memory_space<vmem>>, vector<8x8xf32>,
    %61 = vector.extract_strided_slice %8 {offsets = [0, 16], sizes = [8, 8], strides = [1, 1]} : vector<8x32xbf16> to vector<8x8xbf16>
    %62 = vector.extract_strided_slice %12 {offsets = [0, 16], sizes = [8, 8], strides = [1, 1]} : vector<8x32xbf16> to vector<8x8xbf16>
    %63 = vector.extract_strided_slice %14 {offsets = [0, 16], sizes = [8, 8], strides = [1, 1]} : vector<8x32xbf16> to vector<8x8xbf16>
    %cst_23 = arith.constant dense<0.000000e+00> : vector<8x8xf32>
    %64 = tpu.matmul %61, %62, %cst_23 {dimension_numbers = #tpu.dot_dimension_numbers<[1], [1], [0], [0], [0, 0, 1, 0], [], []>} : vector<8x8xbf16>, vector<8x8xbf16>, vector<8x8xf32> -> vector<8x8xf32>
    %cst_24 = arith.constant 0xFF800000 : f32
    %65 = vector.broadcast %cst_24 : f32 to vector<8x8xf32>
    %66 = arith.select %22, %64, %65 : vector<8x8xi1>, vector<8x8xf32>
    %cst_25 = arith.constant dense<0xFF800000> : vector<8xf32>
    %67 = vector.multi_reduction <maximumf>, %66, %cst_25 [1] : vector<8x8xf32> to vector<8xf32>
    %68 = vector.shape_cast %67 : vector<8xf32> to vector<8x1xf32>
    %69 = vector.broadcast %68 : vector<8x1xf32> to vector<8x8xf32>
    %70 = arith.subf %66, %69 : vector<8x8xf32>
    %71 = math.exp %70 : vector<8x8xf32>
    %cst_26 = arith.constant dense<0.000000e+00> : vector<8xf32>
    %72 = vector.multi_reduction <add>, %71, %cst_26 [1] : vector<8x8xf32> to vector<8xf32>
    %73 = vector.shape_cast %72 : vector<8xf32> to vector<8x1xf32>
    %74 = tpu.reciprocal %73 {approx = true} : vector<8x1xf32> -> vector<8x1xf32>
    %75 = vector.broadcast %74 : vector<8x1xf32> to vector<8x8xf32>
    %76 = arith.mulf %71, %75 : vector<8x8xf32>
    %77 = arith.truncf %76 : vector<8x8xf32> to vector<8x8xbf16>
    %cst_27 = arith.constant dense<0.000000e+00> : vector<8x8xf32>
    %78 = tpu.matmul %77, %63, %cst_27 {dimension_numbers = #tpu.dot_dimension_numbers<[1], [0], [0], [1], [0, 0, 1, 1], [], []>} : vector<8x8xbf16>, vector<8x8xbf16>, vector<8x8xf32> -> vector<8x8xf32>
    %c0_28 = arith.constant 0 : index
    %c16 = arith.constant 16 : index
    %79 = vector.load %arg9[%c0_28, %c16] : memref<8x32xf32, #tpu.memory_space<vmem>>, vector<8x8xf32>
    tpu.vector_store %arg9[%c0_28, %c16], %78 {strides = array<i32>} : memref<8x32xf32, #tpu.memory_space<vmem>>, vector<8x8xf32>,
    %80 = vector.extract_strided_slice %8 {offsets = [0, 24], sizes = [8, 8], strides = [1, 1]} : vector<8x32xbf16> to vector<8x8xbf16>
    %81 = vector.extract_strided_slice %12 {offsets = [0, 24], sizes = [8, 8], strides = [1, 1]} : vector<8x32xbf16> to vector<8x8xbf16>
    %82 = vector.extract_strided_slice %14 {offsets = [0, 24], sizes = [8, 8], strides = [1, 1]} : vector<8x32xbf16> to vector<8x8xbf16>
    %cst_29 = arith.constant dense<0.000000e+00> : vector<8x8xf32>
    %83 = tpu.matmul %80, %81, %cst_29 {dimension_numbers = #tpu.dot_dimension_numbers<[1], [1], [0], [0], [0, 0, 1, 0], [], []>} : vector<8x8xbf16>, vector<8x8xbf16>, vector<8x8xf32> -> vector<8x8xf32>
    %cst_30 = arith.constant 0xFF800000 : f32
    %84 = vector.broadcast %cst_30 : f32 to vector<8x8xf32>
    %85 = arith.select %22, %83, %84 : vector<8x8xi1>, vector<8x8xf32>
    %cst_31 = arith.constant dense<0xFF800000> : vector<8xf32>
    %86 = vector.multi_reduction <maximumf>, %85, %cst_31 [1] : vector<8x8xf32> to vector<8xf32>
    %87 = vector.shape_cast %86 : vector<8xf32> to vector<8x1xf32>
    %88 = vector.broadcast %87 : vector<8x1xf32> to vector<8x8xf32>
    %89 = arith.subf %85, %88 : vector<8x8xf32>
    %90 = math.exp %89 : vector<8x8xf32>
    %cst_32 = arith.constant dense<0.000000e+00> : vector<8xf32>
    %91 = vector.multi_reduction <add>, %90, %cst_32 [1] : vector<8x8xf32> to vector<8xf32>
    %92 = vector.shape_cast %91 : vector<8xf32> to vector<8x1xf32>
    %93 = tpu.reciprocal %92 {approx = true} : vector<8x1xf32> -> vector<8x1xf32>
    %94 = vector.broadcast %93 : vector<8x1xf32> to vector<8x8xf32>
    %95 = arith.mulf %90, %94 : vector<8x8xf32>
    %96 = arith.truncf %95 : vector<8x8xf32> to vector<8x8xbf16>
    %cst_33 = arith.constant dense<0.000000e+00> : vector<8x8xf32>
    %97 = tpu.matmul %96, %82, %cst_33 {dimension_numbers = #tpu.dot_dimension_numbers<[1], [0], [0], [1], [0, 0, 1, 1], [], []>} : vector<8x8xbf16>, vector<8x8xbf16>, vector<8x8xf32> -> vector<8x8xf32>
    %c0_34 = arith.constant 0 : index
    %c24 = arith.constant 24 : index
    %98 = vector.load %arg9[%c0_34, %c24] : memref<8x32xf32, #tpu.memory_space<vmem>>, vector<8x8xf32>
    tpu.vector_store %arg9[%c0_34, %c24], %97 {strides = array<i32>} : memref<8x32xf32, #tpu.memory_space<vmem>>, vector<8x8xf32>,
    %c0_35 = arith.constant 0 : index
    %c0_36 = arith.constant 0 : index
    %99 = vector.load %arg9[%c0_35, %c0_36] : memref<8x32xf32, #tpu.memory_space<vmem>>, vector<8x32xf32>
    %100 = arith.truncf %99 : vector<8x32xf32> to vector<8x32xbf16>
    %c0_37 = arith.constant 0 : index
    %c0_38 = arith.constant 0 : index
    %101 = vector.load %arg6[%c0_37, %c0_38] : memref<32x32xbf16, #tpu.memory_space<vmem>>, vector<32x32xbf16>
    %cst_39 = arith.constant dense<0.000000e+00> : vector<8x32xf32>
    %102 = tpu.matmul %100, %101, %cst_39 {dimension_numbers = #tpu.dot_dimension_numbers<[1], [0], [0], [1], [0, 0, 1, 1], [], []>} : vector<8x32xbf16>, vector<32x32xbf16>, vector<8x32xf32> -> vector<8x32xf32>
    %c0_40 = arith.constant 0 : index
    %c0_41 = arith.constant 0 : index
    %103 = vector.load %arg7[%c0_40, %c0_41] : memref<1x32xf32, #tpu.memory_space<vmem>>, vector<1x32xf32>
    %104 = vector.broadcast %103 : vector<1x32xf32> to vector<8x32xf32>
    %105 = arith.addf %102, %104 : vector<8x32xf32>
    %c0_42 = arith.constant 0 : index
    %c0_43 = arith.constant 0 : index
    %c0_44 = arith.constant 0 : index
    %106 = vector.load %arg8[%c0_42, %c0_43, %c0_44] : memref<1x8x32xf32, #tpu.memory_space<vmem>>, vector<1x8x32xf32>
    %107 = vector.shape_cast %106 : vector<1x8x32xf32> to vector<8x32xf32>
    %108 = vector.shape_cast %105 : vector<8x32xf32> to vector<1x8x32xf32>
    tpu.vector_store %arg8[%c0_42, %c0_43, %c0_44], %108 {strides = array<i32>} : memref<1x8x32xf32, #tpu.memory_space<vmem>>, vector<1x8x32xf32>,
    return
  }
  func.func @transform_0(%arg0: i32, %arg1: i32) -> (i32, i32, i32) {
    %c0_i32 = arith.constant 0 : i32
    %c0_i32_0 = arith.constant 0 : i32
    %c0_i32_1 = arith.constant 0 : i32
    return %arg0, %c0_i32, %c0_i32_0 : i32, i32, i32
  }
  func.func @transform_1(%arg0: i32, %arg1: i32) -> (i32, i32, i32) {
    %c0_i32 = arith.constant 0 : i32
    %c0_i32_0 = arith.constant 0 : i32
    return %arg0, %arg1, %c0_i32 : i32, i32, i32
  }
  func.func @transform_2(%arg0: i32, %arg1: i32) -> (i32, i32) {
    %c0_i32 = arith.constant 0 : i32
    %c0_i32_0 = arith.constant 0 : i32
    %c0_i32_1 = arith.constant 0 : i32
    return %c0_i32, %c0_i32_0 : i32, i32
  }
  func.func @transform_3(%arg0: i32, %arg1: i32) -> (i32, i32) {
    %c0_i32 = arith.constant 0 : i32
    %c0_i32_0 = arith.constant 0 : i32
    %c0_i32_1 = arith.constant 0 : i32
    return %c0_i32, %c0_i32_0 : i32, i32
  }
  func.func @transform_4(%arg0: i32, %arg1: i32) -> (i32, i32) {
    %c0_i32 = arith.constant 0 : i32
    %c0_i32_0 = arith.constant 0 : i32
    %c0_i32_1 = arith.constant 0 : i32
    return %c0_i32, %c0_i32_0 : i32, i32
  }
  func.func @transform_5(%arg0: i32, %arg1: i32) -> (i32, i32) {
    %c0_i32 = arith.constant 0 : i32
    %c0_i32_0 = arith.constant 0 : i32
    %c0_i32_1 = arith.constant 0 : i32
    return %c0_i32, %c0_i32_0 : i32, i32
  }
  func.func @transform_6(%arg0: i32, %arg1: i32) -> (i32, i32, i32) {
    %c0_i32 = arith.constant 0 : i32
    %c0_i32_0 = arith.constant 0 : i32
    return %arg0, %arg1, %c0_i32 : i32, i32, i32
  }
}

</mosaic_0001>

<llo_original>
// kernel: tpu_custom_call.1
$region0: #{tpu_custom_call.1}
  #allocation0 [shape = 'u32[]', space=smem, size = 0x4, offset = 0x4, fixed_abs, tag = 'smem constant byte address 0x4 - core index']
  #allocation1 [shape = 'u32[72,128]{1,0:T(1,128)}', space=vmem, size = 0x9000, scoped, tag = 'internal scratch']
  #allocation2 [shape = 'f32[8,32]{1,0:T(8,128)}', space=vmem, size = 0x1000, scoped, tag = 'scratch operand']
  %s0 = inlined_call_operand.hbm [shape: f32[2,8,32], index: 0, kind: input, shape index: {}]
  %s1 = inlined_call_operand.hbm [shape: f32[2,8,32], index: 1, kind: input, shape index: {}]
  %s2 = inlined_call_operand.hbm [shape: bf16[32,32], index: 2, kind: input, shape index: {}]
  %s3 = inlined_call_operand.hbm [shape: bf16[32,64], index: 3, kind: input, shape index: {}]
  %s4 = inlined_call_operand.hbm [shape: bf16[32,32], index: 4, kind: input, shape index: {}]
  %s5 = inlined_call_operand.vmem [shape: f32[1,32], index: 5, kind: input, shape index: {}]
  %s6 = inlined_call_operand.hbm [shape: f32[2,8,32], index: 6, kind: output, shape index: {}]
  %s7 = sld [smem:[#allocation0]]
  $region77: #{tpu_custom_call.1} parent=0
    _
  %s9 = ssub.s32 1, %s7
  %s10 = scalar_select 0, %s9, %s7
  $region1: #{tpu_custom_call.1} parent=0
    #allocation3 [shape = 'u8[8192]{0}', space=vmem, size = 0x2000, scoped, tag = 'input window, operand 0']
    #allocation4 [shape = 's32[2]{0}', space=sflag, size = 0x8, scoped, tag = 'scoped memory for tpu_custom_call.1']
    #allocation5 [shape = 's32[2]{0}', space=sflag, size = 0x8, scoped, tag = 'scoped memory for tpu_custom_call.1']
    #allocation6 [shape = 'u8[8192]{0}', space=vmem, size = 0x2000, scoped, tag = 'input window, operand 1']
    #allocation7 [shape = 's32[2]{0}', space=sflag, size = 0x8, scoped, tag = 'scoped memory for tpu_custom_call.1']
    #allocation8 [shape = 'u8[8192]{0}', space=vmem, size = 0x2000, scoped, tag = 'input window, operand 2, single buffered']
    #allocation9 [shape = 'u8[8192]{0}', space=vmem, size = 0x2000, scoped, tag = 'input window, operand 3, single buffered']
    #allocation10 [shape = 's32[1]{0}', space=sflag, size = 0x4, scoped, tag = 'scoped memory for tpu_custom_call.1']
    #allocation11 [shape = 'u8[8192]{0}', space=vmem, size = 0x2000, scoped, tag = 'input window, operand 4, single buffered']
    #allocation12 [shape = 'u8[8192]{0}', space=vmem, size = 0x2000, scoped, tag = 'output window, operand 0']
    %11 = vsyncpa [#allocation4], 0
    %s12 = scalar_lea.sflag [#allocation4], 1
    %13 = vsyncpa %s12, 0
    %14 = vsyncpa [#allocation7], 0
    %s15 = scalar_lea.sflag [#allocation7], 1
    %16 = vsyncpa %s15, 0
    %17 = vsyncpa [#allocation10], 0
    %18 = vsyncpa [#allocation5], 0
    %s19 = scalar_lea.sflag [#allocation5], 1
    %20 = vsyncpa %s19, 0
    loop: start=0, step=1, limit=4
    $region2: #{tpu_custom_call.1} parent=1 // loop_pre_header
      _
    $region3: #{tpu_custom_call.1} parent=1 // loop_header
      %s22 = sphi 0, %s26
      %p23 = scmp.ge.s32.totalorder %s22, 4
      %s29 = sphi 0, %s41
      %s30 = sphi 0, %s37
      %s31 = sphi 0, %s29
      %s32 = sphi 0, %s30
      %s33 = sphi 0, %s31
      %s34 = sphi 0, %s32
      %s44 = sphi 0, %s46
      %s47 = sphi 0, %s44
      %s48 = sphi 0, %s47
      %s64 = sphi 0, %s48
      %s72 = sphi 0, %s74
      %s75 = sphi 0, %s72
      %s76 = sphi 0, %s75
      %s92 = sphi 0, %s76
      %s96 = sphi 0, %s96
      %s98 = sphi 0, %s96
      %s99 = sphi 0, %s98
      %s113 = sphi 0, %s99
      %s117 = sphi 0, %s117
      %s119 = sphi 0, %s117
      %s120 = sphi 0, %s119
      %s134 = sphi 0, %s120
      %s138 = sphi 0, %s138
      %s140 = sphi 0, %s138
      %s141 = sphi 0, %s140
      %s155 = sphi 0, %s141
      %s159 = sphi 0, %s159
      %s161 = sphi 0, %s159
      %s162 = sphi 0, %s161
      %s176 = sphi 0, %s162
      %s184 = sphi 0, %s186
      %s187 = sphi 0, %s184
      %s188 = sphi 0, %s187
      %s204 = sphi 0, %s188
    $region4: #{tpu_custom_call.1} parent=1 // loop_header_branch
      %25 = sbr.rel (%p23) target = $region8
    $region5: #{tpu_custom_call.1} parent=1 // loop_body
      %s27 = ssub.s32 %s22, 1
      %s28 = ssub.s32 %s22, 2
      %s35 = sadd.s32 1, %s30
      %p36 = scmp.ge.s32.totalorder %s35, 1
      %s37 = scalar_select %p36, 0, %s35
      %s38 = sadd.s32 1, %s29
      %s39 = scalar_select %p36, %s38, %s29
      %p40 = scmp.ge.s32.totalorder %s39, 2
      %s41 = scalar_select %p40, 0, %s39
      %s42 = ssub.s32 %s29, %s41
      %p43 = scmp.eq.s32.totalorder %s42, 0
      %s45 = sadd.s32 %s44, 1
      %s46 = scalar_select %p43, %s44, %s45
      %p49 = pneg %p43
      %p50 = scmp.eq.s32.totalorder %s22, 1
      %p51 = por %p49, %p50
      %p52 = scmp.ne.s32.totalorder %s44, %s47
      %p53 = scmp.eq.s32.totalorder %s22, 0
      %p54 = por %p52, %p53
      %p55 = scmp.ne.s32.totalorder %s44, %s47
      %p56 = scmp.eq.s32.totalorder %s27, 1
      %p57 = por %p55, %p56
      %p58 = scmp.ne.s32.totalorder %s47, %s48
      %p59 = scmp.eq.s32.totalorder %s27, 0
      %p60 = por %p58, %p59
      %p61 = scmp.ne.s32.totalorder %s47, %s48
      %p62 = scmp.eq.s32.totalorder %s28, 1
      %p63 = por %p61, %p62
      %p65 = scmp.ne.s32.totalorder %s48, %s64
      %p66 = scmp.eq.s32.totalorder %s28, 0
      %p67 = por %p65, %p66
      %s68 = ssub.s32 %s29, %s41
      %s69 = ssub.s32 %s30, %s37
      %s70 = sor.u32 %s68, %s69
      %p71 = scmp.eq.s32.totalorder %s70, 0
      %s73 = sadd.s32 %s72, 1
      %s74 = scalar_select %p71, %s72, %s73
      %p77 = pneg %p71
      %p78 = scmp.eq.s32.totalorder %s22, 1
      %p79 = por %p77, %p78
      %p80 = scmp.ne.s32.totalorder %s72, %s75
      %p81 = scmp.eq.s32.totalorder %s22, 0
      %p82 = por %p80, %p81
      %p83 = scmp.ne.s32.totalorder %s72, %s75
      %p84 = scmp.eq.s32.totalorder %s27, 1
      %p85 = por %p83, %p84
      %p86 = scmp.ne.s32.totalorder %s75, %s76
      %p87 = scmp.eq.s32.totalorder %s27, 0
      %p88 = por %p86, %p87
      %p89 = scmp.ne.s32.totalorder %s75, %s76
      %p90 = scmp.eq.s32.totalorder %s28, 1
      %p91 = por %p89, %p90
      %p93 = scmp.ne.s32.totalorder %s76, %s92
      %p94 = scmp.eq.s32.totalorder %s28, 0
      %p95 = por %p93, %p94
      %s97 = sadd.s32 %s96, 1
      %p100 = scmp.eq.s32.totalorder %s22, 1
      %p101 = scmp.ne.s32.totalorder %s96, %s98
      %p102 = scmp.eq.s32.totalorder %s22, 0
      %p103 = por %p101, %p102
      %p104 = scmp.ne.s32.totalorder %s96, %s98
      %p105 = scmp.eq.s32.totalorder %s27, 1
      %p106 = por %p104, %p105
      %p107 = scmp.ne.s32.totalorder %s98, %s99
      %p108 = scmp.eq.s32.totalorder %s27, 0
      %p109 = por %p107, %p108
      %p110 = scmp.ne.s32.totalorder %s98, %s99
      %p111 = scmp.eq.s32.totalorder %s28, 1
      %p112 = por %p110, %p111
      %p114 = scmp.ne.s32.totalorder %s99, %s113
      %p115 = scmp.eq.s32.totalorder %s28, 0
      %p116 = por %p114, %p115
      %s118 = sadd.s32 %s117, 1
      %p121 = scmp.eq.s32.totalorder %s22, 1
      %p122 = scmp.ne.s32.totalorder %s117, %s119
      %p123 = scmp.eq.s32.totalorder %s22, 0
      %p124 = por %p122, %p123
      %p125 = scmp.ne.s32.totalorder %s117, %s119
      %p126 = scmp.eq.s32.totalorder %s27, 1
      %p127 = por %p125, %p126
      %p128 = scmp.ne.s32.totalorder %s119, %s120
      %p129 = scmp.eq.s32.totalorder %s27, 0
      %p130 = por %p128, %p129
      %p131 = scmp.ne.s32.totalorder %s119, %s120
      %p132 = scmp.eq.s32.totalorder %s28, 1
      %p133 = por %p131, %p132
      %p135 = scmp.ne.s32.totalorder %s120, %s134
      %p136 = scmp.eq.s32.totalorder %s28, 0
      %p137 = por %p135, %p136
      %s139 = sadd.s32 %s138, 1
      %p142 = scmp.eq.s32.totalorder %s22, 1
      %p143 = scmp.ne.s32.totalorder %s138, %s140
      %p144 = scmp.eq.s32.totalorder %s22, 0
      %p145 = por %p143, %p144
      %p146 = scmp.ne.s32.totalorder %s138, %s140
      %p147 = scmp.eq.s32.totalorder %s27, 1
      %p148 = por %p146, %p147
      %p149 = scmp.ne.s32.totalorder %s140, %s141
      %p150 = scmp.eq.s32.totalorder %s27, 0
      %p151 = por %p149, %p150
      %p152 = scmp.ne.s32.totalorder %s140, %s141
      %p153 = scmp.eq.s32.totalorder %s28, 1
      %p154 = por %p152, %p153
      %p156 = scmp.ne.s32.totalorder %s141, %s155
      %p157 = scmp.eq.s32.totalorder %s28, 0
      %p158 = por %p156, %p157
      %s160 = sadd.s32 %s159, 1
      %p163 = scmp.eq.s32.totalorder %s22, 1
      %p164 = scmp.ne.s32.totalorder %s159, %s161
      %p165 = scmp.eq.s32.totalorder %s22, 0
      %p166 = por %p164, %p165
      %p167 = scmp.ne.s32.totalorder %s159, %s161
      %p168 = scmp.eq.s32.totalorder %s27, 1
      %p169 = por %p167, %p168
      %p170 = scmp.ne.s32.totalorder %s161, %s162
      %p171 = scmp.eq.s32.totalorder %s27, 0
      %p172 = por %p170, %p171
      %p173 = scmp.ne.s32.totalorder %s161, %s162
      %p174 = scmp.eq.s32.totalorder %s28, 1
      %p175 = por %p173, %p174
      %p177 = scmp.ne.s32.totalorder %s162, %s176
      %p178 = scmp.eq.s32.totalorder %s28, 0
      %p179 = por %p177, %p178
      %s180 = ssub.s32 %s29, %s41
      %s181 = ssub.s32 %s30, %s37
      %s182 = sor.u32 %s180, %s181
      %p183 = scmp.eq.s32.totalorder %s182, 0
      %s185 = sadd.s32 %s184, 1
      %s186 = scalar_select %p183, %s184, %s185
      %p189 = pneg %p183
      %p190 = scmp.eq.s32.totalorder %s22, 1
      %p191 = por %p189, %p190
      %p192 = scmp.ne.s32.totalorder %s184, %s187
      %p193 = scmp.eq.s32.totalorder %s22, 0
      %p194 = por %p192, %p193
      %p195 = scmp.ne.s32.totalorder %s184, %s187
      %p196 = scmp.eq.s32.totalorder %s27, 1
      %p197 = por %p195, %p196
      %p198 = scmp.ne.s32.totalorder %s187, %s188
      %p199 = scmp.eq.s32.totalorder %s27, 0
      %p200 = por %p198, %p199
      %p201 = scmp.ne.s32.totalorder %s187, %s188
      %p202 = scmp.eq.s32.totalorder %s28, 1
      %p203 = por %p201, %p202
      %p205 = scmp.ne.s32.totalorder %s188, %s204
      %p206 = scmp.eq.s32.totalorder %s28, 0
      %p207 = por %p205, %p206
      %p208 = scmp.le.s32.totalorder 1, %s22
      %p209 = scmp.lt.s32.totalorder %s22, 3
      %p210 = pnand %p208, %p209
      %p211 = pneg %p210
      // Predicated region
      $region9: #{tpu_custom_call.1} parent=5 // pred_check
        _
      $region10: #{tpu_custom_call.1} parent=5 // pred_check_branch
        %213 = sbr.rel (%p210) target = $region12
      $region11: #{tpu_custom_call.1} parent=5 // pred_region
        %s214 = ssub.s32 %s22, 1
        // Predicated region
        $region13: #{tpu_custom_call.1} parent=11 // pred_check
          %p215 = pneg %p109
        $region14: #{tpu_custom_call.1} parent=11 // pred_check_branch
          %217 = sbr.rel (%p215) target = $region16
        $region15: #{tpu_custom_call.1} parent=11 // pred_region
          %219 = vsyncadd [#allocation7], 0
          %s220 = sshll.u32 %s2, 4
          %s221 = int_to_ptr.hbm [resolvable:$true] %s220
          %s222 = sshll.u32 [#allocation8], 4
          %s223 = int_to_ptr.vmem [resolvable:$true] %s222
          %228 = dma.hbm_to_vmem [thread:$0]  %s221, 256, %s223, [#allocation7], 64, 64, 4
        $region16: #{tpu_custom_call.1} parent=11 // pred_fallthru
          _
        // Predicated region
        $region17: #{tpu_custom_call.1} parent=11 // pred_check
          %p229 = pneg %p130
        $region18: #{tpu_custom_call.1} parent=11 // pred_check_branch
          %231 = sbr.rel (%p229) target = $region20
        $region19: #{tpu_custom_call.1} parent=11 // pred_region
          %233 = vsyncadd [#allocation10], 0
          %s234 = sshll.u32 %s3, 4
          %s235 = int_to_ptr.hbm [resolvable:$true] %s234
          %s236 = sshll.u32 [#allocation9], 4
          %s237 = int_to_ptr.vmem [resolvable:$true] %s236
          %242 = dma.hbm_to_vmem [thread:$0]  %s235, 256, %s237, [#allocation10], 64, 64, 4
        $region20: #{tpu_custom_call.1} parent=11 // pred_fallthru
          _
        // Predicated region
        $region21: #{tpu_custom_call.1} parent=11 // pred_check
          %p243 = pneg %p151
        $region22: #{tpu_custom_call.1} parent=11 // pred_check_branch
          %245 = sbr.rel (%p243) target = $region24
        $region23: #{tpu_custom_call.1} parent=11 // pred_region
          %247 = vsyncadd [#allocation10], 0
          %s248 = sshll.u32 %s4, 4
          %s249 = int_to_ptr.hbm [resolvable:$true] %s248
          %s250 = sshll.u32 [#allocation11], 4
          %s251 = int_to_ptr.vmem [resolvable:$true] %s250
          %256 = dma.hbm_to_vmem [thread:$0]  %s249, 256, %s251, [#allocation10], 64, 64, 4
        $region24: #{tpu_custom_call.1} parent=11 // pred_fallthru
          _
        // Predicated region
        $region25: #{tpu_custom_call.1} parent=11 // pred_check
          %p257 = pneg %p172
        $region26: #{tpu_custom_call.1} parent=11 // pred_check_branch
          %259 = sbr.rel (%p257) target = $region28
        $region27: #{tpu_custom_call.1} parent=11 // pred_region
          _
        $region28: #{tpu_custom_call.1} parent=11 // pred_fallthru
          _
      $region12: #{tpu_custom_call.1} parent=5 // pred_fallthru
        _
      %p260 = scmp.lt.s32.totalorder %s22, 2
      // Predicated region
      $region29: #{tpu_custom_call.1} parent=5 // pred_check
        %p261 = pneg %p260
      $region30: #{tpu_custom_call.1} parent=5 // pred_check_branch
        %263 = sbr.rel (%p261) target = $region32
      $region31: #{tpu_custom_call.1} parent=5 // pred_region
        // Predicated region
        $region33: #{tpu_custom_call.1} parent=31 // pred_check
          %p264 = pneg %p54
        $region34: #{tpu_custom_call.1} parent=31 // pred_check_branch
          %266 = sbr.rel (%p264) target = $region36
        $region35: #{tpu_custom_call.1} parent=31 // pred_region
          %s267 = sand.u32 %s44, 1
          %s268 = scalar_lea.sflag [#allocation4], %s267
          %s269 = sand.u32 %s44, 1
          %s270 = smul.addr %s269, 8
          %s271 = scalar_lea.vmem [#allocation3], %s270
          %273 = vsyncadd %s268, 0
          %s274 = smul.addr %s29, 8
          %s275 = scalar_lea.hbm %s0, %s274
          %s277 = sshll.u32 %s275, 4
          %s278 = int_to_ptr.hbm [resolvable:$true] %s277
          %s279 = sshll.u32 %s271, 4
          %s280 = int_to_ptr.vmem [resolvable:$true] %s279
          %282 = dma.hbm_to_vmem [thread:$0]  %s278, 128, %s280, %s268
        $region36: #{tpu_custom_call.1} parent=31 // pred_fallthru
          _
        // Predicated region
        $region37: #{tpu_custom_call.1} parent=31 // pred_check
          %p283 = pneg %p82
        $region38: #{tpu_custom_call.1} parent=31 // pred_check_branch
          %285 = sbr.rel (%p283) target = $region40
        $region39: #{tpu_custom_call.1} parent=31 // pred_region
          %s286 = sand.u32 %s22, 1
          %s287 = scalar_lea.sflag [#allocation7], %s286
          %s288 = sand.u32 %s72, 1
          %s289 = smul.addr %s288, 8
          %s290 = scalar_lea.vmem [#allocation6], %s289
          %292 = vsyncadd %s287, 0
          %s293 = sadd.s32 %s30, %s29
          %s294 = smul.addr %s293, 8
          %s295 = scalar_lea.hbm %s1, %s294
          %s297 = sshll.u32 %s295, 4
          %s298 = int_to_ptr.hbm [resolvable:$true] %s297
          %s299 = sshll.u32 %s290, 4
          %s300 = int_to_ptr.vmem [resolvable:$true] %s299
          %302 = dma.hbm_to_vmem [thread:$0]  %s298, 128, %s300, %s287
        $region40: #{tpu_custom_call.1} parent=31 // pred_fallthru
          _
      $region32: #{tpu_custom_call.1} parent=5 // pred_fallthru
        _
      %p303 = scmp.le.s32.totalorder 1, %s22
      %p304 = scmp.lt.s32.totalorder %s22, 3
      %p305 = pnand %p303, %p304
      %p306 = pneg %p305
      // Predicated region
      $region41: #{tpu_custom_call.1} parent=5 // pred_check
        _
      $region42: #{tpu_custom_call.1} parent=5 // pred_check_branch
        %308 = sbr.rel (%p305) target = $region44
      $region43: #{tpu_custom_call.1} parent=5 // pred_region
        %s309 = ssub.s32 %s22, 1
        %s310 = sand.u32 %s47, 1
        %s311 = scalar_lea.sflag [#allocation4], %s310
        %s312 = sand.u32 %s47, 1
        %s313 = smul.addr %s312, 8
        %s314 = scalar_lea.vmem [#allocation3], %s313
        // Predicated region
        $region45: #{tpu_custom_call.1} parent=43 // pred_check
          %p315 = pneg %p60
        $region46: #{tpu_custom_call.1} parent=43 // pred_check_branch
          %317 = sbr.rel (%p315) target = $region48
        $region47: #{tpu_custom_call.1} parent=43 // pred_region
          %319 = dma.done %s311, 128
        $region48: #{tpu_custom_call.1} parent=43 // pred_fallthru
          _
        %s320 = sand.u32 %s27, 1
        %s321 = scalar_lea.sflag [#allocation7], %s320
        %s322 = sand.u32 %s75, 1
        %s323 = smul.addr %s322, 8
        %s324 = scalar_lea.vmem [#allocation6], %s323
        // Predicated region
        $region49: #{tpu_custom_call.1} parent=43 // pred_check
          %p325 = pneg %p88
        $region50: #{tpu_custom_call.1} parent=43 // pred_check_branch
          %327 = sbr.rel (%p325) target = $region52
        $region51: #{tpu_custom_call.1} parent=43 // pred_region
          %329 = dma.done %s321, 128
        $region52: #{tpu_custom_call.1} parent=43 // pred_fallthru
          _
        // Predicated region
        $region53: #{tpu_custom_call.1} parent=43 // pred_check
          %p330 = pneg %p109
        $region54: #{tpu_custom_call.1} parent=43 // pred_check_branch
          %332 = sbr.rel (%p330) target = $region56
        $region55: #{tpu_custom_call.1} parent=43 // pred_region
          %334 = dma.done [#allocation7], 256
        $region56: #{tpu_custom_call.1} parent=43 // pred_fallthru
          _
        // Predicated region
        $region57: #{tpu_custom_call.1} parent=43 // pred_check
          %p335 = pneg %p130
        $region58: #{tpu_custom_call.1} parent=43 // pred_check_branch
          %337 = sbr.rel (%p335) target = $region60
        $region59: #{tpu_custom_call.1} parent=43 // pred_region
          %339 = dma.done [#allocation10], 256
        $region60: #{tpu_custom_call.1} parent=43 // pred_fallthru
          _
        // Predicated region
        $region61: #{tpu_custom_call.1} parent=43 // pred_check
          %p340 = pneg %p151
        $region62: #{tpu_custom_call.1} parent=43 // pred_check_branch
          %342 = sbr.rel (%p340) target = $region64
        $region63: #{tpu_custom_call.1} parent=43 // pred_region
          %344 = dma.done [#allocation10], 256
        $region64: #{tpu_custom_call.1} parent=43 // pred_fallthru
          _
        %s345 = sand.u32 %s47, 1
        %s346 = scalar_lea.sflag [#allocation4], %s345
        %s347 = sand.u32 %s47, 1
        %s348 = smul.addr %s347, 8
        %s349 = scalar_lea.vmem [#allocation3], %s348
        %p350 = pneg %p60
        %p351 = pneg %p57
        %s352 = sand.u32 %s27, 1
        %s353 = scalar_lea.sflag [#allocation7], %s352
        %s354 = sand.u32 %s75, 1
        %s355 = smul.addr %s354, 8
        %s356 = scalar_lea.vmem [#allocation6], %s355
        %p357 = pneg %p88
        %p358 = pneg %p85
        %p359 = pneg %p109
        %p360 = pneg %p106
        %p361 = pneg %p130
        %p362 = pneg %p127
        %p363 = pneg %p151
        %p364 = pneg %p148
        %p365 = pneg %p172
        %p366 = pneg %p169
        %p367 = pneg %p200
        %p368 = pneg %p197
        %s369 = sand.u32 %s187, 1
        %s370 = scalar_lea.sflag [#allocation5], %s369
        %s371 = sand.u32 %s187, 1
        %s372 = smul.addr %s371, 8
        %s373 = scalar_lea.vmem [#allocation12], %s372
        %v375 = vld [vmem:[%s314] sm:$0xff]
        %v376 = vpack.c.bf16 %v375, %v375
        %v377 = vld [vmem:[%s324] sm:$0xff]
        %v378 = vpack.c.bf16 %v377, %v377
        %v379 = vld [vmem:[#allocation8] sm:$0xf]
        %v380 = vld [vmem:[#allocation8 + $0x4] sm:$0xf]
        %v381 = vld [vmem:[#allocation8 + $0x8] sm:$0xf]
        %v382 = vld [vmem:[#allocation8 + $0xc] sm:$0xf]
        %v387 = vunpack.c.l.b16 %v379
        %v388 = vunpack.c.l.b16 %v380
        %v389 = vunpack.c.l.b16 %v381
        %v390 = vunpack.c.l.b16 %v382
        %v391 = vpack.c.b16 %v388, %v387
        %v392 = vpack.c.b16 %v390, %v389
        %vm395 = vcmask 261120
        %v397 = vsel %vm395, %v378, 0
        %399 = vmatpush.bf16.msra.mxu0 0
        %400 = vmatpush.bf16.msra.mxu0 0
        %401 = vmatpush.bf16.msra.mxu0 0
        %402 = vmatpush.bf16.msra.mxu0 0
        %403 = vmatpush.bf16.msra.mxu0 0
        %404 = vmatpush.bf16.msra.mxu0 0
        %405 = vmatpush.bf16.msra.mxu0 %v392
        %406 = vmatpush.bf16.msra.mxu0 %v391
        %407 = vmatmul.bf16.gmra.mxu0 %v397
        %v408 = vpop.f32.mrf.mxu0
        %v409 = vadd.f32 0.0, %v408
        %v410 = vpop.f32.mrf.mxu0
        %411 = vdwg.mxu0
        %v412 = vpack.c.bf16 %v409, %v409
        %v413 = vld [vmem:[#allocation9] sm:$0xf]
        %v414 = vld [vmem:[#allocation9 + $0x4] sm:$0xf]
        %v415 = vld [vmem:[#allocation9 + $0x8] sm:$0xf]
        %v416 = vld [vmem:[#allocation9 + $0xc] sm:$0xf]
        %v421 = vunpack.c.l.b16 %v413
        %v422 = vunpack.c.l.b16 %v414
        %v423 = vunpack.c.l.b16 %v415
        %v424 = vunpack.c.l.b16 %v416
        %v425 = vpack.c.b16 %v422, %v421
        %v426 = vpack.c.b16 %v424, %v423
        %v430 = vsel %vm395, %v376, 0
        %432 = vmatpush.bf16.msra.mxu0 0
        %433 = vmatpush.bf16.msra.mxu0 0
        %434 = vmatpush.bf16.msra.mxu0 0
        %435 = vmatpush.bf16.msra.mxu0 0
        %436 = vmatpush.bf16.msra.mxu0 0
        %437 = vmatpush.bf16.msra.mxu0 0
        %438 = vmatpush.bf16.msra.mxu0 %v426
        %439 = vmatpush.bf16.msra.mxu0 %v425
        %440 = vmatmul.bf16.gmra.mxu0 %v430
        %v441 = vpop.f32.mrf.mxu0
        %v442 = vadd.f32 0.0, %v441
        %v443 = vpop.f32.mrf.mxu0
        %444 = vdwg.mxu0
        %v445 = vpack.c.bf16 %v442, %v442
        %s446 = smul.u32 %s32, 8
        %v447 = vlaneseq
        %v448 = vshrl.u32 %v447, 7
        %v449 = vstv %s446
        %v450 = vadd.s32 %v449, %v448
        %v451 = vlaneseq
        %v452 = vand.u32 %v451, 127
        %v453 = vadd.s32 %v450, 1
        %vm454 = vcmp.le.s32.totalorder %v452, %v453
        %vm455 = vcmask 64512
        %v457 = vsel %vm455, %v412, 0
        %v460 = vsel %vm455, %v445, 0
        %462 = vmatpush.bf16.xpose.msra.mxu0 0
        %463 = vmatpush.bf16.xpose.msra.mxu0 0
        %464 = vmatpush.bf16.xpose.msra.mxu0 0
        %465 = vmatpush.bf16.xpose.msra.mxu0 0
        %466 = vmatpush.bf16.xpose.msra.mxu0 0
        %467 = vmatpush.bf16.xpose.msra.mxu0 0
        %468 = vmatpush.bf16.xpose.msra.mxu0 0
        %469 = vmatpush.bf16.xpose.msra.mxu0 %v460
        %470 = vmatmul.bf16.gmra.mxu0 %v457
        %v471 = vpop.f32.mrf.mxu0
        %v472 = vadd.f32 0.0, %v471
        %v473 = vpop.f32.mrf.mxu0
        %474 = vdwg.mxu0
        %v475 = vsel %vm454, %v472, -inf
        %v476 = vsel %vm455, %v475, -inf
        %477 = vmax.xlane.f32.xlu0 %v476
        %v478 = vpop.xlane.xlu0 %477
        %v479 = vsub.f32 %v475, %v478
        %v480 = vmul.f32 %v479, 1.442695
        %v481 = vpow.pop %v480
        %v482 = vsel %vm455, %v481, 0.0
        %483 = vadd.xlane.f32.xlu0 %v482
        %v484 = vpop.xlane.xlu0 %483
        %v485 = vrcp.pop %v484
        %v486 = vmul.f32 %v481, %v485
        %v487 = vpack.c.bf16 %v486, %v486
        %v489 = vunpack.c.l.b16 %v445
        %v490 = vpack.c.b16 %v489, %v489
        %491 = vrot.lane.b32.xlu0 %v490, 96
        %v492 = vpop.permute.xlu0 %491
        %v494 = vsel %vm455, %v487, 0
        %vm496 = vcmask 1043456
        %v498 = vsel %vm496, %v492, 0
        %500 = vmatpush.bf16.msra.mxu0 0
        %501 = vmatpush.bf16.msra.mxu0 0
        %502 = vmatpush.bf16.msra.mxu0 0
        %503 = vmatpush.bf16.msra.mxu0 0
        %504 = vmatpush.bf16.msra.mxu0 0
        %505 = vmatpush.bf16.msra.mxu0 0
        %506 = vmatpush.bf16.msra.mxu0 0
        %507 = vmatpush.bf16.msra.mxu0 %v498
        %508 = vmatmul.bf16.gmra.mxu0 %v494
        %v509 = vpop.f32.mrf.mxu0
        %v510 = vadd.f32 0.0, %v509
        %v511 = vpop.f32.mrf.mxu0
        %512 = vdwg.mxu0
        %513 = vst.msk [vmem:[#allocation2] sm:$0xff] %vm455, %v510
        %v515 = vunpack.c.l.b16 %v412
        %v516 = vpack.c.b16 %v515, %v515
        %517 = vrot.lane.b32.xlu0 %v516, 120
        %v518 = vpop.permute.xlu0 %517
        %519 = vrot.lane.b32.xlu0 %v490, 120
        %v520 = vpop.permute.xlu0 %519
        %v522 = vsel %vm455, %v518, 0
        %v525 = vsel %vm455, %v520, 0
        %527 = vmatpush.bf16.xpose.msra.mxu0 0
        %528 = vmatpush.bf16.xpose.msra.mxu0 0
        %529 = vmatpush.bf16.xpose.msra.mxu0 0
        %530 = vmatpush.bf16.xpose.msra.mxu0 0
        %531 = vmatpush.bf16.xpose.msra.mxu0 0
        %532 = vmatpush.bf16.xpose.msra.mxu0 0
        %533 = vmatpush.bf16.xpose.msra.mxu0 0
        %534 = vmatpush.bf16.xpose.msra.mxu0 %v525
        %535 = vmatmul.bf16.gmra.mxu0 %v522
        %v536 = vpop.f32.mrf.mxu0
        %v537 = vadd.f32 0.0, %v536
        %v538 = vpop.f32.mrf.mxu0
        %539 = vdwg.mxu0
        %v540 = vsel %vm454, %v537, -inf
        %v541 = vsel %vm455, %v540, -inf
        %542 = vmax.xlane.f32.xlu0 %v541
        %v543 = vpop.xlane.xlu0 %542
        %v544 = vsub.f32 %v540, %v543
        %v545 = vmul.f32 %v544, 1.442695
        %v546 = vpow.pop %v545
        %v547 = vsel %vm455, %v546, 0.0
        %548 = vadd.xlane.f32.xlu0 %v547
        %v549 = vpop.xlane.xlu0 %548
        %v550 = vrcp.pop %v549
        %v551 = vmul.f32 %v546, %v550
        %v552 = vpack.c.bf16 %v551, %v551
        %553 = vrot.lane.b32.xlu0 %v490, 88
        %v554 = vpop.permute.xlu0 %553
        %v556 = vsel %vm455, %v552, 0
        %v559 = vsel %vm496, %v554, 0
        %561 = vmatpush.bf16.msra.mxu0 0
        %562 = vmatpush.bf16.msra.mxu0 0
        %563 = vmatpush.bf16.msra.mxu0 0
        %564 = vmatpush.bf16.msra.mxu0 0
        %565 = vmatpush.bf16.msra.mxu0 0
        %566 = vmatpush.bf16.msra.mxu0 0
        %567 = vmatpush.bf16.msra.mxu0 0
        %568 = vmatpush.bf16.msra.mxu0 %v559
        %569 = vmatmul.bf16.gmra.mxu0 %v556
        %v570 = vpop.f32.mrf.mxu0
        %v571 = vadd.f32 0.0, %v570
        %v572 = vpop.f32.mrf.mxu0
        %573 = vdwg.mxu0
        %575 = vrot.lane.b32.xlu0 %v571, 8
        %v576 = vpop.permute.xlu0 %575
        %vm578 = vcmask 130112
        %579 = vst.msk [vmem:[#allocation2] sm:$0xff] %vm578, %v576
        %580 = vrot.lane.b32.xlu0 %v516, 112
        %v581 = vpop.permute.xlu0 %580
        %582 = vrot.lane.b32.xlu0 %v490, 112
        %v583 = vpop.permute.xlu0 %582
        %v585 = vsel %vm455, %v581, 0
        %v588 = vsel %vm455, %v583, 0
        %590 = vmatpush.bf16.xpose.msra.mxu0 0
        %591 = vmatpush.bf16.xpose.msra.mxu0 0
        %592 = vmatpush.bf16.xpose.msra.mxu0 0
        %593 = vmatpush.bf16.xpose.msra.mxu0 0
        %594 = vmatpush.bf16.xpose.msra.mxu0 0
        %595 = vmatpush.bf16.xpose.msra.mxu0 0
        %596 = vmatpush.bf16.xpose.msra.mxu0 0
        %597 = vmatpush.bf16.xpose.msra.mxu0 %v588
        %598 = vmatmul.bf16.gmra.mxu0 %v585
        %v599 = vpop.f32.mrf.mxu0
        %v600 = vadd.f32 0.0, %v599
        %v601 = vpop.f32.mrf.mxu0
        %602 = vdwg.mxu0
        %v603 = vsel %vm454, %v600, -inf
        %v604 = vsel %vm455, %v603, -inf
        %605 = vmax.xlane.f32.xlu0 %v604
        %v606 = vpop.xlane.xlu0 %605
        %v607 = vsub.f32 %v603, %v606
        %v608 = vmul.f32 %v607, 1.442695
        %v609 = vpow.pop %v608
        %v610 = vsel %vm455, %v609, 0.0
        %611 = vadd.xlane.f32.xlu0 %v610
        %v612 = vpop.xlane.xlu0 %611
        %v613 = vrcp.pop %v612
        %v614 = vmul.f32 %v609, %v613
        %v615 = vpack.c.bf16 %v614, %v614
        %616 = vrot.lane.b32.xlu0 %v490, 80
        %v617 = vpop.permute.xlu0 %616
        %v619 = vsel %vm455, %v615, 0
        %v622 = vsel %vm496, %v617, 0
        %624 = vmatpush.bf16.msra.mxu0 0
        %625 = vmatpush.bf16.msra.mxu0 0
        %626 = vmatpush.bf16.msra.mxu0 0
        %627 = vmatpush.bf16.msra.mxu0 0
        %628 = vmatpush.bf16.msra.mxu0 0
        %629 = vmatpush.bf16.msra.mxu0 0
        %630 = vmatpush.bf16.msra.mxu0 0
        %631 = vmatpush.bf16.msra.mxu0 %v622
        %632 = vmatmul.bf16.gmra.mxu0 %v619
        %v633 = vpop.f32.mrf.mxu0
        %v634 = vadd.f32 0.0, %v633
        %v635 = vpop.f32.mrf.mxu0
        %636 = vdwg.mxu0
        %638 = vrot.lane.b32.xlu0 %v634, 16
        %v639 = vpop.permute.xlu0 %638
        %vm641 = vcmask 195712
        %642 = vst.msk [vmem:[#allocation2] sm:$0xff] %vm641, %v639
        %643 = vrot.lane.b32.xlu0 %v516, 104
        %v644 = vpop.permute.xlu0 %643
        %645 = vrot.lane.b32.xlu0 %v490, 104
        %v646 = vpop.permute.xlu0 %645
        %v648 = vsel %vm455, %v644, 0
        %v651 = vsel %vm455, %v646, 0
        %653 = vmatpush.bf16.xpose.msra.mxu0 0
        %654 = vmatpush.bf16.xpose.msra.mxu0 0
        %655 = vmatpush.bf16.xpose.msra.mxu0 0
        %656 = vmatpush.bf16.xpose.msra.mxu0 0
        %657 = vmatpush.bf16.xpose.msra.mxu0 0
        %658 = vmatpush.bf16.xpose.msra.mxu0 0
        %659 = vmatpush.bf16.xpose.msra.mxu0 0
        %660 = vmatpush.bf16.xpose.msra.mxu0 %v651
        %661 = vmatmul.bf16.gmra.mxu0 %v648
        %v662 = vpop.f32.mrf.mxu0
        %v663 = vadd.f32 0.0, %v662
        %v664 = vpop.f32.mrf.mxu0
        %665 = vdwg.mxu0
        %v666 = vsel %vm454, %v663, -inf
        %v667 = vsel %vm455, %v666, -inf
        %668 = vmax.xlane.f32.xlu0 %v667
        %v669 = vpop.xlane.xlu0 %668
        %v670 = vsub.f32 %v666, %v669
        %v671 = vmul.f32 %v670, 1.442695
        %v672 = vpow.pop %v671
        %v673 = vsel %vm455, %v672, 0.0
        %674 = vadd.xlane.f32.xlu0 %v673
        %v675 = vpop.xlane.xlu0 %674
        %v676 = vrcp.pop %v675
        %v677 = vmul.f32 %v672, %v676
        %v678 = vpack.c.bf16 %v677, %v677
        %679 = vrot.lane.b32.xlu0 %v490, 72
        %v680 = vpop.permute.xlu0 %679
        %v682 = vsel %vm455, %v678, 0
        %v685 = vsel %vm496, %v680, 0
        %687 = vmatpush.bf16.msra.mxu0 0
        %688 = vmatpush.bf16.msra.mxu0 0
        %689 = vmatpush.bf16.msra.mxu0 0
        %690 = vmatpush.bf16.msra.mxu0 0
        %691 = vmatpush.bf16.msra.mxu0 0
        %692 = vmatpush.bf16.msra.mxu0 0
        %693 = vmatpush.bf16.msra.mxu0 0
        %694 = vmatpush.bf16.msra.mxu0 %v685
        %695 = vmatmul.bf16.gmra.mxu0 %v682
        %v696 = vpop.f32.mrf.mxu0
        %v697 = vadd.f32 0.0, %v696
        %v698 = vpop.f32.mrf.mxu0
        %699 = vdwg.mxu0
        %701 = vrot.lane.b32.xlu0 %v697, 24
        %v702 = vpop.permute.xlu0 %701
        %vm704 = vcmask 261312
        %705 = vst.msk [vmem:[#allocation2] sm:$0xff] %vm704, %v702
        %v706 = vld [vmem:[#allocation2] sm:$0xff]
        %v707 = vpack.c.bf16 %v706, %v706
        %v708 = vld [vmem:[#allocation11] sm:$0xf]
        %v709 = vld [vmem:[#allocation11 + $0x4] sm:$0xf]
        %v710 = vld [vmem:[#allocation11 + $0x8] sm:$0xf]
        %v711 = vld [vmem:[#allocation11 + $0xc] sm:$0xf]
        %v712 = vld [vmem:[%s5] sm:$0x1]
        %v714 = vperm.slane %v712, 0
        %v720 = vunpack.c.l.b16 %v708
        %v721 = vunpack.c.l.b16 %v709
        %v722 = vunpack.c.l.b16 %v710
        %v723 = vunpack.c.l.b16 %v711
        %v724 = vpack.c.b16 %v721, %v720
        %v725 = vpack.c.b16 %v723, %v722
        %v729 = vsel %vm395, %v707, 0
        %731 = vmatpush.bf16.msra.mxu0 0
        %732 = vmatpush.bf16.msra.mxu0 0
        %733 = vmatpush.bf16.msra.mxu0 0
        %734 = vmatpush.bf16.msra.mxu0 0
        %735 = vmatpush.bf16.msra.mxu0 0
        %736 = vmatpush.bf16.msra.mxu0 0
        %737 = vmatpush.bf16.msra.mxu0 %v725
        %738 = vmatpush.bf16.msra.mxu0 %v724
        %739 = vmatmul.bf16.gmra.mxu0 %v729
        %v740 = vpop.f32.mrf.mxu0
        %v741 = vadd.f32 %v714, %v740
        %v742 = vpop.f32.mrf.mxu0
        %743 = vdwg.mxu0
        %744 = vst.msk [vmem:[%s373] sm:$0xff] %vm395, %v741
        %s745 = sand.u32 %s187, 1
        %s746 = scalar_lea.sflag [#allocation5], %s745
        %s747 = sand.u32 %s187, 1
        %s748 = smul.addr %s747, 8
        %s749 = scalar_lea.vmem [#allocation12], %s748
        // Predicated region
        $region65: #{tpu_custom_call.1} parent=43 // pred_check
          %p750 = pneg %p197
        $region66: #{tpu_custom_call.1} parent=43 // pred_check_branch
          %752 = sbr.rel (%p750) target = $region68
        $region67: #{tpu_custom_call.1} parent=43 // pred_region
          %754 = vsyncadd %s746, 0
          %s755 = sadd.s32 %s32, %s31
          %s756 = smul.addr %s755, 8
          %s757 = scalar_lea.hbm %s6, %s756
          %s759 = sshll.u32 %s749, 4
          %s760 = int_to_ptr.vmem [resolvable:$true] %s759
          %s761 = sshll.u32 %s757, 4
          %s762 = int_to_ptr.hbm [resolvable:$true] %s761
          %764 = dma.vmem_to_hbm [thread:$0]  %s760, 128, %s762, %s746
        $region68: #{tpu_custom_call.1} parent=43 // pred_fallthru
          _
      $region44: #{tpu_custom_call.1} parent=5 // pred_fallthru
        _
      %p765 = scmp.le.s32.totalorder 2, %s22
      // Predicated region
      $region69: #{tpu_custom_call.1} parent=5 // pred_check
        %p766 = pneg %p765
      $region70: #{tpu_custom_call.1} parent=5 // pred_check_branch
        %768 = sbr.rel (%p766) target = $region72
      $region71: #{tpu_custom_call.1} parent=5 // pred_region
        %s769 = ssub.s32 %s22, 2
        // Predicated region
        $region73: #{tpu_custom_call.1} parent=71 // pred_check
          %p770 = pneg %p203
        $region74: #{tpu_custom_call.1} parent=71 // pred_check_branch
          %772 = sbr.rel (%p770) target = $region76
        $region75: #{tpu_custom_call.1} parent=71 // pred_region
          %s773 = sand.u32 %s188, 1
          %s774 = scalar_lea.sflag [#allocation5], %s773
          %s775 = sand.u32 %s188, 1
          %s776 = smul.addr %s775, 8
          %s777 = scalar_lea.vmem [#allocation12], %s776
          %779 = dma.done %s774, 128
        $region76: #{tpu_custom_call.1} parent=71 // pred_fallthru
          _
      $region72: #{tpu_custom_call.1} parent=5 // pred_fallthru
        _
    $region6: #{tpu_custom_call.1} parent=1 // loop_footer
      %s26 = sadd.s32 1, %s22
    $region7: #{tpu_custom_call.1} parent=1 // loop_footer_branch
      %21 = sbr.rel target = $region3
    $region8: #{tpu_custom_call.1} parent=1 // loop_exit
      _
    %780 = vsyncpa [#allocation4], 1
    %s781 = scalar_lea.sflag [#allocation4], 1
    %782 = vsyncpa %s781, 1
    %783 = vsyncpa [#allocation7], 1
    %s784 = scalar_lea.sflag [#allocation7], 1
    %785 = vsyncpa %s784, 1
    %786 = vsyncpa [#allocation10], 1
    %787 = vsyncpa [#allocation5], 1
    %s788 = scalar_lea.sflag [#allocation5], 1
    %789 = vsyncpa %s788, 1

</llo_original>
